<compile_context>
chip_gen: v6e
topology: v6e:2x2x1
jax: 0.10.0
libtpu: 0.0.40
codegen_flags: <defaults>
</compile_context>

<pallas_src>
import jax
import jax.numpy as jnp
from jax.experimental import pallas as pl
from jax.experimental.pallas import tpu as pltpu

NUM_CHANNELS = 3   # num_channels in the module
NUM_CLASSES = 16   # stands in for the 1000 ImageNet classes (small synthetic size)
VGG_SIZE = 32      # stands in for the 224 VGG input resolution
IMAGENET_MEAN = (0.485, 0.456, 0.406)
IMAGENET_STD = (0.229, 0.224, 0.225)


# ---------------------------------------------------------------------------
# Fused kernel: reflection pad + separable grouped Sobel + class-sum scaling
# ---------------------------------------------------------------------------
def _sobel_kernel(x_ref, p_ref, ox_ref, oy_ref):
    C, H, W = x_ref.shape[1], x_ref.shape[2], x_ref.shape[3]
    x = x_ref[0]                                   # (C, H, W) for this batch item

    # Replicated Sobel filters + softmax over classes  =>  the torch reduction
    # sum_k(outx[:, i*K+k] * p_k) collapses to sx * sum_k(p_k).  Keep the actual
    # sum (== 1 up to rounding) to preserve the original numerics.
    psum = jnp.sum(p_ref[...])

    # Fused nn.ReflectionPad2d(1): build the padded plane in registers/VMEM,
    # never materializing it in HBM.  Reflection: pad[-1] = x[1], pad[N] = x[N-2].
    xp = jnp.concatenate([x[:, 1:2, :], x, x[:, H - 2:H - 1, :]], axis=1)     # (C, H+2, W)
    xp = jnp.concatenate([xp[:, :, 1:2], xp, xp[:, :, W - 2:W - 1]], axis=2)  # (C, H+2, W+2)

    # Separable Sobel (cross-correlation, as torch Conv2d does).
    # Horizontal pass over all padded rows:
    hdiff = xp[:, :, 2:] - xp[:, :, :-2]                            # x[.,j+1]-x[.,j-1]
    hsum = xp[:, :, :-2] + 2.0 * xp[:, :, 1:-1] + xp[:, :, 2:]      # x[.,j-1]+2x+x[.,j+1]
    # Vertical combine:
    sx = hdiff[:, :-2, :] + 2.0 * hdiff[:, 1:-1, :] + hdiff[:, 2:, :]   # (C, H, W)
    sy = hsum[:, 2:, :] - hsum[:, :-2, :]                               # (C, H, W)

    ox_ref[0] = psum * sx
    oy_ref[0] = psum * sy


def sobel_weighted(x, p):
    """x: (B, C, H, W) float32, p: (B, K) softmax probs -> (sobelx, sobely)."""
    B, C, H, W = x.shape
    K = p.shape[-1]
    p3 = p.reshape(B, 1, K)
    out_shape = (
        jax.ShapeDtypeStruct((B, C, H, W), jnp.float32),
        jax.ShapeDtypeStruct((B, C, H, W), jnp.float32),
    )
    return pl.pallas_call(
        _sobel_kernel,
        out_shape=out_shape,
        grid=(B,),
        in_specs=[
            pl.BlockSpec((1, C, H, W), lambda b: (b, 0, 0, 0)),
            pl.BlockSpec((1, 1, K), lambda b: (b, 0, 0)),
        ],
        out_specs=(
            pl.BlockSpec((1, C, H, W), lambda b: (b, 0, 0, 0)),
            pl.BlockSpec((1, C, H, W), lambda b: (b, 0, 0, 0)),
        ),
        compiler_params=pltpu.CompilerParams(
            dimension_semantics=("parallel",)
        ),
    )(x, p3)


# ---------------------------------------------------------------------------
# Forward (preprocessing + classifier stand-in in plain JAX, hot path in Pallas)
# ---------------------------------------------------------------------------
def vgg_sobel_forward(x, clf_w):
    B, C, H, W = x.shape

    # F.interpolate(x, size=(VGG_SIZE, VGG_SIZE), mode='bilinear') / 255.0
    xr = jax.image.resize(x, (B, C, VGG_SIZE, VGG_SIZE), method="bilinear") / 255.0
    mean = jnp.asarray(IMAGENET_MEAN, jnp.float32).reshape(1, C, 1, 1)
    std = jnp.asarray(IMAGENET_STD, jnp.float32).reshape(1, C, 1, 1)
    img = (xr - mean) / std

    # TODO(synk): torchvision vgg16(pretrained=True) cannot be reproduced
    # in-script; it is replaced by a deterministic linear classifier + softmax so
    # that p has identical shape/semantics (B, num_classes) summing to 1.  Per the
    # perf review this tiny matmul+softmax is left to XLA (a Pallas launch costs
    # more than the math at (2, 3072) x (3072, 16)).
    feats = img.reshape(B, -1)
    p = jax.nn.softmax(feats @ clf_w, axis=1)        # (B, K)

    # Fused reflection pad + grouped Sobel convs + class-weighted reduction
    # (the torch loop over range(3) with sum over dim=1).
    sobelx, sobely = sobel_weighted(x, p)            # each (B, C, H, W)
    return sobelx, sobely


# ---------------------------------------------------------------------------
# Pure-JAX reference for the fused Sobel path (correctness check)
# ---------------------------------------------------------------------------
def _sobel_ref(x, p):
    B, C, H, W = x.shape
    xp = jnp.pad(x, ((0, 0), (0, 0), (1, 1), (1, 1)), mode="reflect")
    tl = xp[:, :, 0:H, 0:W];     tc = xp[:, :, 0:H, 1:W + 1];     tr = xp[:, :, 0:H, 2:W + 2]
    ml = xp[:, :, 1:H + 1, 0:W];                                  mr = xp[:, :, 1:H + 1, 2:W + 2]
    bl = xp[:, :, 2:H + 2, 0:W]; bc = xp[:, :, 2:H + 2, 1:W + 1]; br = xp[:, :, 2:H + 2, 2:W + 2]
    sx = (tr - tl) + 2.0 * (mr - ml) + (br - bl)
    sy = (bl - tl) + 2.0 * (bc - tc) + (br - tr)
    psum = jnp.sum(p, axis=1).reshape(B, 1, 1, 1)
    return sx * psum, sy * psum


if __name__ == "__main__":
    key = jax.random.PRNGKey(0)
    kx, kw = jax.random.split(key)

    B, H, W = 2, 16, 16
    x = jax.random.uniform(kx, (B, NUM_CHANNELS, H, W), jnp.float32, 0.0, 255.0)

    F_dim = NUM_CHANNELS * VGG_SIZE * VGG_SIZE
    clf_w = jax.random.normal(kw, (F_dim, NUM_CLASSES), jnp.float32) * 0.02

    sobelx, sobely = jax.jit(vgg_sobel_forward)(x, clf_w)
    jax.block_until_ready((sobelx, sobely))

    assert sobelx.shape == (B, NUM_CHANNELS, H, W), sobelx.shape
    assert sobely.shape == (B, NUM_CHANNELS, H, W), sobely.shape
    assert sobelx.dtype == jnp.float32 and sobely.dtype == jnp.float32

    # Correctness check against a pure-JAX reference of the Sobel hot path.
    feats_ref = ((jax.image.resize(x, (B, NUM_CHANNELS, VGG_SIZE, VGG_SIZE),
                                   method="bilinear") / 255.0
                  - jnp.asarray(IMAGENET_MEAN, jnp.float32).reshape(1, NUM_CHANNELS, 1, 1))
                 / jnp.asarray(IMAGENET_STD, jnp.float32).reshape(1, NUM_CHANNELS, 1, 1)
                 ).reshape(B, -1)
    p_ref = jax.nn.softmax(feats_ref @ clf_w, axis=1)
    rx, ry = _sobel_ref(x, p_ref)
    assert jnp.allclose(sobelx, rx, rtol=1e-4, atol=1e-3), float(jnp.max(jnp.abs(sobelx - rx)))
    assert jnp.allclose(sobely, ry, rtol=1e-4, atol=1e-3), float(jnp.max(jnp.abs(sobely - ry)))

    print("KERNEL_OK")
</pallas_src>

<mosaic_0001>
module attributes {stable_mosaic.version = 11 : i64} {
  func.func @_sobel_kernel(%arg0: i32, %arg1: memref<1x3x16x16xf32, #tpu.memory_space<vmem>>, %arg2: memref<1x1x16xf32, #tpu.memory_space<vmem>>, %arg3: memref<1x3x16x16xf32, #tpu.memory_space<vmem>>, %arg4: memref<1x3x16x16xf32, #tpu.memory_space<vmem>>) attributes {dimension_semantics = [#tpu.dimension_semantics<parallel>], iteration_bounds = array<i64: 2>, scalar_prefetch = 0 : i64, scratch_operands = 0 : i64, tpu.core_type = #tpu.core_type<tc>, window_params = [{transform_indices = @transform_0, window_bounds = array<i64: 1, 3, 16, 16>}, {transform_indices = @transform_1, window_bounds = array<i64: 1, 1, 16>}, {transform_indices = @transform_2, window_bounds = array<i64: 1, 3, 16, 16>}, {transform_indices = @transform_3, window_bounds = array<i64: 1, 3, 16, 16>}]} {
    %c0 = arith.constant 0 : index
    %c0_0 = arith.constant 0 : index
    %c0_1 = arith.constant 0 : index
    %c0_2 = arith.constant 0 : index
    %0 = vector.load %arg1[%c0, %c0_0, %c0_1, %c0_2] : memref<1x3x16x16xf32, #tpu.memory_space<vmem>>, vector<1x3x16x16xf32>
    %1 = vector.shape_cast %0 : vector<1x3x16x16xf32> to vector<3x16x16xf32>
    %c0_3 = arith.constant 0 : index
    %c0_4 = arith.constant 0 : index
    %c0_5 = arith.constant 0 : index
    %2 = vector.load %arg2[%c0_3, %c0_4, %c0_5] : memref<1x1x16xf32, #tpu.memory_space<vmem>>, vector<1x1x16xf32>
    %3 = vector.shape_cast %2 : vector<1x1x16xf32> to vector<1x1x1x16xf32>
    %cst = arith.constant dense<0.000000e+00> : vector<1xf32>
    %4 = vector.multi_reduction <add>, %3, %cst [1, 2, 3] : vector<1x1x1x16xf32> to vector<1xf32>
    %5 = vector.shape_cast %4 : vector<1xf32> to vector<1x1x1x1xf32>
    %6 = vector.extract %5[0, 0, 0, 0] : f32 from vector<1x1x1x1xf32>
    %7 = vector.extract_strided_slice %1 {offsets = [0, 1, 0], sizes = [3, 1, 16], strides = [1, 1, 1]} : vector<3x16x16xf32> to vector<3x1x16xf32>
    %8 = vector.extract_strided_slice %1 {offsets = [0, 14, 0], sizes = [3, 1, 16], strides = [1, 1, 1]} : vector<3x16x16xf32> to vector<3x1x16xf32>
    %9 = tpu.concatenate %7, %1, %8 in 1 : vector<3x1x16xf32>, vector<3x16x16xf32>, vector<3x1x16xf32> -> vector<3x18x16xf32>
    %10 = vector.extract_strided_slice %9 {offsets = [0, 0, 1], sizes = [3, 18, 1], strides = [1, 1, 1]} : vector<3x18x16xf32> to vector<3x18x1xf32>
    %11 = vector.extract_strided_slice %9 {offsets = [0, 0, 14], sizes = [3, 18, 1], strides = [1, 1, 1]} : vector<3x18x16xf32> to vector<3x18x1xf32>
    %12 = tpu.concatenate %10, %9, %11 in 2 : vector<3x18x1xf32>, vector<3x18x16xf32>, vector<3x18x1xf32> -> vector<3x18x18xf32>
    %13 = vector.extract_strided_slice %12 {offsets = [0, 0, 2], sizes = [3, 18, 16], strides = [1, 1, 1]} : vector<3x18x18xf32> to vector<3x18x16xf32>
    %14 = vector.extract_strided_slice %12 {offsets = [0, 0, 0], sizes = [3, 18, 16], strides = [1, 1, 1]} : vector<3x18x18xf32> to vector<3x18x16xf32>
    %15 = arith.subf %13, %14 : vector<3x18x16xf32>
    %16 = vector.extract_strided_slice %12 {offsets = [0, 0, 0], sizes = [3, 18, 16], strides = [1, 1, 1]} : vector<3x18x18xf32> to vector<3x18x16xf32>
    %17 = vector.extract_strided_slice %12 {offsets = [0, 0, 1], sizes = [3, 18, 16], strides = [1, 1, 1]} : vector<3x18x18xf32> to vector<3x18x16xf32>
    %cst_6 = arith.constant 2.000000e+00 : f32
    %18 = vector.broadcast %cst_6 : f32 to vector<3x18x16xf32>
    %19 = arith.mulf %18, %17 : vector<3x18x16xf32>
    %20 = arith.addf %16, %19 : vector<3x18x16xf32>
    %21 = vector.extract_strided_slice %12 {offsets = [0, 0, 2], sizes = [3, 18, 16], strides = [1, 1, 1]} : vector<3x18x18xf32> to vector<3x18x16xf32>
    %22 = arith.addf %20, %21 : vector<3x18x16xf32>
    %23 = vector.extract_strided_slice %15 {offsets = [0, 0, 0], sizes = [3, 16, 16], strides = [1, 1, 1]} : vector<3x18x16xf32> to vector<3x16x16xf32>
    %24 = vector.extract_strided_slice %15 {offsets = [0, 1, 0], sizes = [3, 16, 16], strides = [1, 1, 1]} : vector<3x18x16xf32> to vector<3x16x16xf32>
    %cst_7 = arith.constant 2.000000e+00 : f32
    %25 = vector.broadcast %cst_7 : f32 to vector<3x16x16xf32>
    %26 = arith.mulf %25, %24 : vector<3x16x16xf32>
    %27 = arith.addf %23, %26 : vector<3x16x16xf32>
    %28 = vector.extract_strided_slice %15 {offsets = [0, 2, 0], sizes = [3, 16, 16], strides = [1, 1, 1]} : vector<3x18x16xf32> to vector<3x16x16xf32>
    %29 = arith.addf %27, %28 : vector<3x16x16xf32>
    %30 = vector.extract_strided_slice %22 {offsets = [0, 2, 0], sizes = [3, 16, 16], strides = [1, 1, 1]} : vector<3x18x16xf32> to vector<3x16x16xf32>
    %31 = vector.extract_strided_slice %22 {offsets = [0, 0, 0], sizes = [3, 16, 16], strides = [1, 1, 1]} : vector<3x18x16xf32> to vector<3x16x16xf32>
    %32 = arith.subf %30, %31 : vector<3x16x16xf32>
    %33 = vector.broadcast %6 : f32 to vector<3x16x16xf32>
    %34 = arith.mulf %33, %29 : vector<3x16x16xf32>
    %c0_8 = arith.constant 0 : index
    %c0_9 = arith.constant 0 : index
    %c0_10 = arith.constant 0 : index
    %c0_11 = arith.constant 0 : index
    %35 = vector.load %arg3[%c0_8, %c0_9, %c0_10, %c0_11] : memref<1x3x16x16xf32, #tpu.memory_space<vmem>>, vector<1x3x16x16xf32>
    %36 = vector.shape_cast %35 : vector<1x3x16x16xf32> to vector<3x16x16xf32>
    %37 = vector.shape_cast %34 : vector<3x16x16xf32> to vector<1x3x16x16xf32>
    tpu.vector_store %arg3[%c0_8, %c0_9, %c0_10, %c0_11], %37 {strides = array<i32>} : memref<1x3x16x16xf32, #tpu.memory_space<vmem>>, vector<1x3x16x16xf32>,
    %38 = vector.broadcast %6 : f32 to vector<3x16x16xf32>
    %39 = arith.mulf %38, %32 : vector<3x16x16xf32>
    %c0_12 = arith.constant 0 : index
    %c0_13 = arith.constant 0 : index
    %c0_14 = arith.constant 0 : index
    %c0_15 = arith.constant 0 : index
    %40 = vector.load %arg4[%c0_12, %c0_13, %c0_14, %c0_15] : memref<1x3x16x16xf32, #tpu.memory_space<vmem>>, vector<1x3x16x16xf32>
    %41 = vector.shape_cast %40 : vector<1x3x16x16xf32> to vector<3x16x16xf32>
    %42 = vector.shape_cast %39 : vector<3x16x16xf32> to vector<1x3x16x16xf32>
    tpu.vector_store %arg4[%c0_12, %c0_13, %c0_14, %c0_15], %42 {strides = array<i32>} : memref<1x3x16x16xf32, #tpu.memory_space<vmem>>, vector<1x3x16x16xf32>,
    return
  }
  func.func @transform_0(%arg0: i32) -> (i32, i32, i32, i32) {
    %c0_i32 = arith.constant 0 : i32
    %c0_i32_0 = arith.constant 0 : i32
    %c0_i32_1 = arith.constant 0 : i32
    %c0_i32_2 = arith.constant 0 : i32
    return %arg0, %c0_i32, %c0_i32_0, %c0_i32_1 : i32, i32, i32, i32
  }
  func.func @transform_1(%arg0: i32) -> (i32, i32, i32) {
    %c0_i32 = arith.constant 0 : i32
    %c0_i32_0 = arith.constant 0 : i32
    %c0_i32_1 = arith.constant 0 : i32
    return %arg0, %c0_i32, %c0_i32_0 : i32, i32, i32
  }
  func.func @transform_2(%arg0: i32) -> (i32, i32, i32, i32) {
    %c0_i32 = arith.constant 0 : i32
    %c0_i32_0 = arith.constant 0 : i32
    %c0_i32_1 = arith.constant 0 : i32
    %c0_i32_2 = arith.constant 0 : i32
    return %arg0, %c0_i32, %c0_i32_0, %c0_i32_1 : i32, i32, i32, i32
  }
  func.func @transform_3(%arg0: i32) -> (i32, i32, i32, i32) {
    %c0_i32 = arith.constant 0 : i32
    %c0_i32_0 = arith.constant 0 : i32
    %c0_i32_1 = arith.constant 0 : i32
    %c0_i32_2 = arith.constant 0 : i32
    return %arg0, %c0_i32, %c0_i32_0, %c0_i32_1 : i32, i32, i32, i32
  }
}

</mosaic_0001>

<llo_original>
// kernel: vgg_sobel_forward.1
$region0: #{vgg_sobel_forward.1}
  #allocation0 [shape = 'u32[]', space=smem, size = 0x4, offset = 0x4, fixed_abs, tag = 'smem constant byte address 0x4 - core index']
  #allocation1 [shape = 'u32[144,128]{1,0:T(1,128)}', space=vmem, size = 0x12000, scoped, tag = 'internal scratch']
  %s0 = inlined_call_operand.vmem [shape: f32[2,3,16,16], index: 0, kind: input, shape index: {}]
  %s1 = inlined_call_operand.vmem [shape: f32[2,1,16], index: 1, kind: input, shape index: {}]
  %s2 = inlined_call_operand.hbm [shape: f32[2,3,16,16], index: 2, kind: output, shape index: {0}]
  %s3 = inlined_call_operand.hbm [shape: f32[2,3,16,16], index: 3, kind: output, shape index: {1}]
  %4 = xla_tuple %s2, %s3
  %s5 = sld [smem:[#allocation0]]
  $region49: #{vgg_sobel_forward.1} parent=0
    _
  %s7 = ssub.s32 1, %s5
  %s8 = scalar_select 0, %s7, %s5
  $region1: #{vgg_sobel_forward.1} parent=0
    #allocation2 [shape = 'u8[49152]{0}', space=vmem, size = 0xc000, scoped, tag = 'output window, operand 0']
    #allocation3 [shape = 's32[2]{0}', space=sflag, size = 0x8, scoped, tag = 'scoped memory for vgg_sobel_forward.1']
    #allocation4 [shape = 'u8[49152]{0}', space=vmem, size = 0xc000, scoped, tag = 'output window, operand 1']
    #allocation5 [shape = 's32[2]{0}', space=sflag, size = 0x8, scoped, tag = 'scoped memory for vgg_sobel_forward.1']
    %9 = vsyncpa [#allocation3], 0
    %s10 = scalar_lea.sflag [#allocation3], 1
    %11 = vsyncpa %s10, 0
    %12 = vsyncpa [#allocation5], 0
    %s13 = scalar_lea.sflag [#allocation5], 1
    %14 = vsyncpa %s13, 0
    loop: start=0, step=1, limit=4
    $region2: #{vgg_sobel_forward.1} parent=1 // loop_pre_header
      _
    $region3: #{vgg_sobel_forward.1} parent=1 // loop_header
      %s16 = sphi 0, %s20
      %p17 = scmp.ge.s32.totalorder %s16, 4
      %s26 = sphi 0, %s28
      %s29 = sphi 0, %s26
      %s30 = sphi 0, %s29
      %s46 = sphi 0, %s30
      %s52 = sphi 0, %s54
      %s55 = sphi 0, %s52
      %s56 = sphi 0, %s55
      %s72 = sphi 0, %s56
      %s78 = sphi 0, %s80
      %s81 = sphi 0, %s78
      %s82 = sphi 0, %s81
      %s98 = sphi 0, %s82
      %s104 = sphi 0, %s106
      %s107 = sphi 0, %s104
      %s108 = sphi 0, %s107
      %s124 = sphi 0, %s108
    $region4: #{vgg_sobel_forward.1} parent=1 // loop_header_branch
      %19 = sbr.rel (%p17) target = $region8
    $region5: #{vgg_sobel_forward.1} parent=1 // loop_body
      %s21 = ssub.s32 %s16, 1
      %s22 = ssub.s32 %s16, 2
      %s23 = sadd.s32 %s16, 1
      %s24 = ssub.s32 %s16, %s23
      %p25 = scmp.eq.s32.totalorder %s24, 0
      %s27 = sadd.s32 %s26, 1
      %s28 = scalar_select %p25, %s26, %s27
      %p31 = pneg %p25
      %p32 = scmp.eq.s32.totalorder %s16, 1
      %p33 = por %p31, %p32
      %p34 = scmp.ne.s32.totalorder %s26, %s29
      %p35 = scmp.eq.s32.totalorder %s16, 0
      %p36 = por %p34, %p35
      %p37 = scmp.ne.s32.totalorder %s26, %s29
      %p38 = scmp.eq.s32.totalorder %s21, 1
      %p39 = por %p37, %p38
      %p40 = scmp.ne.s32.totalorder %s29, %s30
      %p41 = scmp.eq.s32.totalorder %s21, 0
      %p42 = por %p40, %p41
      %p43 = scmp.ne.s32.totalorder %s29, %s30
      %p44 = scmp.eq.s32.totalorder %s22, 1
      %p45 = por %p43, %p44
      %p47 = scmp.ne.s32.totalorder %s30, %s46
      %p48 = scmp.eq.s32.totalorder %s22, 0
      %p49 = por %p47, %p48
      %s50 = ssub.s32 %s16, %s23
      %p51 = scmp.eq.s32.totalorder %s50, 0
      %s53 = sadd.s32 %s52, 1
      %s54 = scalar_select %p51, %s52, %s53
      %p57 = pneg %p51
      %p58 = scmp.eq.s32.totalorder %s16, 1
      %p59 = por %p57, %p58
      %p60 = scmp.ne.s32.totalorder %s52, %s55
      %p61 = scmp.eq.s32.totalorder %s16, 0
      %p62 = por %p60, %p61
      %p63 = scmp.ne.s32.totalorder %s52, %s55
      %p64 = scmp.eq.s32.totalorder %s21, 1
      %p65 = por %p63, %p64
      %p66 = scmp.ne.s32.totalorder %s55, %s56
      %p67 = scmp.eq.s32.totalorder %s21, 0
      %p68 = por %p66, %p67
      %p69 = scmp.ne.s32.totalorder %s55, %s56
      %p70 = scmp.eq.s32.totalorder %s22, 1
      %p71 = por %p69, %p70
      %p73 = scmp.ne.s32.totalorder %s56, %s72
      %p74 = scmp.eq.s32.totalorder %s22, 0
      %p75 = por %p73, %p74
      %s76 = ssub.s32 %s16, %s23
      %p77 = scmp.eq.s32.totalorder %s76, 0
      %s79 = sadd.s32 %s78, 1
      %s80 = scalar_select %p77, %s78, %s79
      %p83 = pneg %p77
      %p84 = scmp.eq.s32.totalorder %s16, 1
      %p85 = por %p83, %p84
      %p86 = scmp.ne.s32.totalorder %s78, %s81
      %p87 = scmp.eq.s32.totalorder %s16, 0
      %p88 = por %p86, %p87
      %p89 = scmp.ne.s32.totalorder %s78, %s81
      %p90 = scmp.eq.s32.totalorder %s21, 1
      %p91 = por %p89, %p90
      %p92 = scmp.ne.s32.totalorder %s81, %s82
      %p93 = scmp.eq.s32.totalorder %s21, 0
      %p94 = por %p92, %p93
      %p95 = scmp.ne.s32.totalorder %s81, %s82
      %p96 = scmp.eq.s32.totalorder %s22, 1
      %p97 = por %p95, %p96
      %p99 = scmp.ne.s32.totalorder %s82, %s98
      %p100 = scmp.eq.s32.totalorder %s22, 0
      %p101 = por %p99, %p100
      %s102 = ssub.s32 %s16, %s23
      %p103 = scmp.eq.s32.totalorder %s102, 0
      %s105 = sadd.s32 %s104, 1
      %s106 = scalar_select %p103, %s104, %s105
      %p109 = pneg %p103
      %p110 = scmp.eq.s32.totalorder %s16, 1
      %p111 = por %p109, %p110
      %p112 = scmp.ne.s32.totalorder %s104, %s107
      %p113 = scmp.eq.s32.totalorder %s16, 0
      %p114 = por %p112, %p113
      %p115 = scmp.ne.s32.totalorder %s104, %s107
      %p116 = scmp.eq.s32.totalorder %s21, 1
      %p117 = por %p115, %p116
      %p118 = scmp.ne.s32.totalorder %s107, %s108
      %p119 = scmp.eq.s32.totalorder %s21, 0
      %p120 = por %p118, %p119
      %p121 = scmp.ne.s32.totalorder %s107, %s108
      %p122 = scmp.eq.s32.totalorder %s22, 1
      %p123 = por %p121, %p122
      %p125 = scmp.ne.s32.totalorder %s108, %s124
      %p126 = scmp.eq.s32.totalorder %s22, 0
      %p127 = por %p125, %p126
      %p128 = scmp.le.s32.totalorder 1, %s16
      %p129 = scmp.lt.s32.totalorder %s16, 3
      %p130 = pnand %p128, %p129
      %p131 = pneg %p130
      // Predicated region
      $region9: #{vgg_sobel_forward.1} parent=5 // pred_check
        _
      $region10: #{vgg_sobel_forward.1} parent=5 // pred_check_branch
        %133 = sbr.rel (%p130) target = $region12
      $region11: #{vgg_sobel_forward.1} parent=5 // pred_region
        %s134 = ssub.s32 %s16, 1
      $region12: #{vgg_sobel_forward.1} parent=5 // pred_fallthru
        _
      %p135 = scmp.lt.s32.totalorder %s16, 2
      // Predicated region
      $region13: #{vgg_sobel_forward.1} parent=5 // pred_check
        %p136 = pneg %p135
      $region14: #{vgg_sobel_forward.1} parent=5 // pred_check_branch
        %138 = sbr.rel (%p136) target = $region16
      $region15: #{vgg_sobel_forward.1} parent=5 // pred_region
        // Predicated region
        $region17: #{vgg_sobel_forward.1} parent=15 // pred_check
          %p139 = pneg %p36
        $region18: #{vgg_sobel_forward.1} parent=15 // pred_check_branch
          %141 = sbr.rel (%p139) target = $region20
        $region19: #{vgg_sobel_forward.1} parent=15 // pred_region
          %p142 = scmp.lt.s32.totalorder %s16, 1
          %s143 = scalar_select %p142, %s16, 1
          %s144 = smul.addr %s143, 6
          %s145 = smul.addr %s144, 8
          %s146 = scalar_lea.vmem %s0, %s145
        $region20: #{vgg_sobel_forward.1} parent=15 // pred_fallthru
          _
        // Predicated region
        $region21: #{vgg_sobel_forward.1} parent=15 // pred_check
          %p147 = pneg %p62
        $region22: #{vgg_sobel_forward.1} parent=15 // pred_check_branch
          %149 = sbr.rel (%p147) target = $region24
        $region23: #{vgg_sobel_forward.1} parent=15 // pred_region
          %p150 = scmp.lt.s32.totalorder %s16, 1
          %s151 = scalar_select %p150, %s16, 1
          %s152 = scalar_lea.vmem %s1, %s151
        $region24: #{vgg_sobel_forward.1} parent=15 // pred_fallthru
          _
      $region16: #{vgg_sobel_forward.1} parent=5 // pred_fallthru
        _
      %p153 = scmp.le.s32.totalorder 1, %s16
      %p154 = scmp.lt.s32.totalorder %s16, 3
      %p155 = pnand %p153, %p154
      %p156 = pneg %p155
      // Predicated region
      $region25: #{vgg_sobel_forward.1} parent=5 // pred_check
        _
      $region26: #{vgg_sobel_forward.1} parent=5 // pred_check_branch
        %158 = sbr.rel (%p155) target = $region28
      $region27: #{vgg_sobel_forward.1} parent=5 // pred_region
        %s159 = ssub.s32 %s16, 1
        %p160 = scmp.lt.s32.totalorder %s21, 1
        %s161 = scalar_select %p160, %s21, 1
        %s162 = smul.addr %s161, 6
        %s163 = smul.addr %s162, 8
        %s164 = scalar_lea.vmem %s0, %s163
        %p165 = pneg %p42
        %p166 = pneg %p39
        %p167 = scmp.lt.s32.totalorder %s21, 1
        %s168 = scalar_select %p167, %s21, 1
        %s169 = scalar_lea.vmem %s1, %s168
        %p170 = pneg %p68
        %p171 = pneg %p65
        %p172 = pneg %p94
        %p173 = pneg %p91
        %s174 = sand.u32 %s81, 1
        %s175 = scalar_lea.sflag [#allocation3], %s174
        %s176 = sand.u32 %s81, 1
        %s177 = smul.addr %s176, 48
        %s178 = scalar_lea.vmem [#allocation2], %s177
        %p179 = pneg %p120
        %p180 = pneg %p117
        %s181 = sand.u32 %s107, 1
        %s182 = scalar_lea.sflag [#allocation5], %s181
        %s183 = sand.u32 %s107, 1
        %s184 = smul.addr %s183, 48
        %s185 = scalar_lea.vmem [#allocation4], %s184
        %p186 = scmp.lt.s32.totalorder %s21, 1
        %s187 = scalar_select %p186, %s21, 1
        %s188 = smul.addr %s187, 6
        %s189 = smul.addr %s188, 8
        %s190 = scalar_lea.vmem %s0, %s189
        %p191 = scmp.lt.s32.totalorder %s21, 1
        %s192 = scalar_select %p191, %s21, 1
        %s193 = scalar_lea.vmem %s1, %s192
        %v194 = vld [vmem:[%s190] sm:$0xff]
        %v195 = vld [vmem:[%s190 + $0x8] sm:$0xff]
        %v196 = vld [vmem:[%s190 + $0x10] sm:$0xff]
        %v197 = vld [vmem:[%s190 + $0x18] sm:$0xff]
        %v198 = vld [vmem:[%s190 + $0x20] sm:$0xff]
        %v199 = vld [vmem:[%s190 + $0x28] sm:$0xff]
        %v200 = vld [vmem:[%s193] sm:$0x1]
        %vm201 = vcmask 122880
        %v202 = vsel %vm201, %v200, 0.0
        %203 = vadd.xlane.f32.xlu0 %v202
        %v204 = vpop.xlane.xlu0 %203
        %v205 = vrot.slane %v204, 4
        %v206 = vadd.f32 %v204, %v205
        %v207 = vrot.slane %v206, 2
        %v208 = vadd.f32 %v206, %v207
        %v209 = vrot.slane %v208, 1
        %v210 = vadd.f32 %v208, %v209
        %s211 = vtos %v210
        %v215 = vrot.slane %v194, 1
        %v216 = vrot.slane %v196, 1
        %v217 = vrot.slane %v198, 1
        %vm224 = vcmask 1040384
        %v225 = vrot.slane %v194, 7
        %v226 = vrot.slane %v195, 7
        %v227 = vsel %vm224, %v225, %v226
        %v228 = vrot.slane %v196, 7
        %v229 = vrot.slane %v197, 7
        %v230 = vsel %vm224, %v228, %v229
        %v231 = vrot.slane %v198, 7
        %v232 = vrot.slane %v199, 7
        %v233 = vsel %vm224, %v231, %v232
        %v240 = vrot.slane %v195, 5
        %v241 = vrot.slane %v197, 5
        %v242 = vrot.slane %v199, 5
        %v246 = vsel %vm224, %v215, %v225
        %v247 = vsel %vm224, %v216, %v228
        %v248 = vsel %vm224, %v217, %v231
        %v249 = vsel %vm224, %v226, %v240
        %v250 = vsel %vm224, %v229, %v241
        %v251 = vsel %vm224, %v232, %v242
        %258 = vrot.lane.b32.xlu0 %v246, 127
        %v259 = vpop.permute.xlu0 %258
        %260 = vrot.lane.b32.xlu0 %v227, 127
        %v261 = vpop.permute.xlu0 %260
        %262 = vrot.lane.b32.xlu0 %v249, 127
        %v263 = vpop.permute.xlu0 %262
        %264 = vrot.lane.b32.xlu0 %v247, 127
        %v265 = vpop.permute.xlu0 %264
        %266 = vrot.lane.b32.xlu0 %v230, 127
        %v267 = vpop.permute.xlu0 %266
        %268 = vrot.lane.b32.xlu0 %v250, 127
        %v269 = vpop.permute.xlu0 %268
        %270 = vrot.lane.b32.xlu0 %v248, 127
        %v271 = vpop.permute.xlu0 %270
        %272 = vrot.lane.b32.xlu0 %v233, 127
        %v273 = vpop.permute.xlu0 %272
        %274 = vrot.lane.b32.xlu0 %v251, 127
        %v275 = vpop.permute.xlu0 %274
        %285 = vrot.lane.b32.xlu0 %v246, 1
        %v286 = vpop.permute.xlu0 %285
        %287 = vrot.lane.b32.xlu0 %v227, 1
        %v288 = vpop.permute.xlu0 %287
        %289 = vrot.lane.b32.xlu0 %v249, 1
        %v290 = vpop.permute.xlu0 %289
        %291 = vrot.lane.b32.xlu0 %v247, 1
        %v292 = vpop.permute.xlu0 %291
        %293 = vrot.lane.b32.xlu0 %v230, 1
        %v294 = vpop.permute.xlu0 %293
        %295 = vrot.lane.b32.xlu0 %v250, 1
        %v296 = vpop.permute.xlu0 %295
        %297 = vrot.lane.b32.xlu0 %v248, 1
        %v298 = vpop.permute.xlu0 %297
        %299 = vrot.lane.b32.xlu0 %v233, 1
        %v300 = vpop.permute.xlu0 %299
        %301 = vrot.lane.b32.xlu0 %v251, 1
        %v302 = vpop.permute.xlu0 %301
        %312 = vrot.lane.b32.xlu0 %v246, 3
        %v313 = vpop.permute.xlu0 %312
        %314 = vrot.lane.b32.xlu0 %v227, 3
        %v315 = vpop.permute.xlu0 %314
        %316 = vrot.lane.b32.xlu0 %v249, 3
        %v317 = vpop.permute.xlu0 %316
        %318 = vrot.lane.b32.xlu0 %v247, 3
        %v319 = vpop.permute.xlu0 %318
        %320 = vrot.lane.b32.xlu0 %v230, 3
        %v321 = vpop.permute.xlu0 %320
        %322 = vrot.lane.b32.xlu0 %v250, 3
        %v323 = vpop.permute.xlu0 %322
        %324 = vrot.lane.b32.xlu0 %v248, 3
        %v325 = vpop.permute.xlu0 %324
        %326 = vrot.lane.b32.xlu0 %v233, 3
        %v327 = vpop.permute.xlu0 %326
        %328 = vrot.lane.b32.xlu0 %v251, 3
        %v329 = vpop.permute.xlu0 %328
        %vm339 = vcmask 7168
        %v340 = vsel %vm339, %v259, %v286
        %v341 = vsel %vm339, %v261, %v288
        %v342 = vsel %vm339, %v263, %v290
        %v343 = vsel %vm339, %v265, %v292
        %v344 = vsel %vm339, %v267, %v294
        %v345 = vsel %vm339, %v269, %v296
        %v346 = vsel %vm339, %v271, %v298
        %v347 = vsel %vm339, %v273, %v300
        %v348 = vsel %vm339, %v275, %v302
        %vm349 = vcmask 138240
        %v350 = vsel %vm349, %v340, %v313
        %v351 = vsel %vm349, %v341, %v315
        %v352 = vsel %vm349, %v342, %v317
        %v353 = vsel %vm349, %v343, %v319
        %v354 = vsel %vm349, %v344, %v321
        %v355 = vsel %vm349, %v345, %v323
        %v356 = vsel %vm349, %v346, %v325
        %v357 = vsel %vm349, %v347, %v327
        %v358 = vsel %vm349, %v348, %v329
        %368 = vrot.lane.b32.xlu0 %v350, 2
        %v369 = vpop.permute.xlu0 %368
        %370 = vrot.lane.b32.xlu0 %v351, 2
        %v371 = vpop.permute.xlu0 %370
        %372 = vrot.lane.b32.xlu0 %v352, 2
        %v373 = vpop.permute.xlu0 %372
        %374 = vrot.lane.b32.xlu0 %v353, 2
        %v375 = vpop.permute.xlu0 %374
        %376 = vrot.lane.b32.xlu0 %v354, 2
        %v377 = vpop.permute.xlu0 %376
        %378 = vrot.lane.b32.xlu0 %v355, 2
        %v379 = vpop.permute.xlu0 %378
        %380 = vrot.lane.b32.xlu0 %v356, 2
        %v381 = vpop.permute.xlu0 %380
        %382 = vrot.lane.b32.xlu0 %v357, 2
        %v383 = vpop.permute.xlu0 %382
        %384 = vrot.lane.b32.xlu0 %v358, 2
        %v385 = vpop.permute.xlu0 %384
        %v395 = vsub.f32 %v350, %v369
        %v396 = vsub.f32 %v351, %v371
        %v397 = vsub.f32 %v352, %v373
        %v398 = vsub.f32 %v353, %v375
        %v399 = vsub.f32 %v354, %v377
        %v400 = vsub.f32 %v355, %v379
        %v401 = vsub.f32 %v356, %v381
        %v402 = vsub.f32 %v357, %v383
        %v403 = vsub.f32 %v358, %v385
        %v404 = vmul.f32 %v350, 2.0
        %v405 = vmul.f32 %v351, 2.0
        %v406 = vmul.f32 %v352, 2.0
        %v407 = vmul.f32 %v353, 2.0
        %v408 = vmul.f32 %v354, 2.0
        %v409 = vmul.f32 %v355, 2.0
        %v410 = vmul.f32 %v356, 2.0
        %v411 = vmul.f32 %v357, 2.0
        %v412 = vmul.f32 %v358, 2.0
        %422 = vrot.lane.b32.xlu0 %v404, 127
        %v423 = vpop.permute.xlu0 %422
        %424 = vrot.lane.b32.xlu0 %v405, 127
        %v425 = vpop.permute.xlu0 %424
        %426 = vrot.lane.b32.xlu0 %v406, 127
        %v427 = vpop.permute.xlu0 %426
        %428 = vrot.lane.b32.xlu0 %v407, 127
        %v429 = vpop.permute.xlu0 %428
        %430 = vrot.lane.b32.xlu0 %v408, 127
        %v431 = vpop.permute.xlu0 %430
        %432 = vrot.lane.b32.xlu0 %v409, 127
        %v433 = vpop.permute.xlu0 %432
        %434 = vrot.lane.b32.xlu0 %v410, 127
        %v435 = vpop.permute.xlu0 %434
        %436 = vrot.lane.b32.xlu0 %v411, 127
        %v437 = vpop.permute.xlu0 %436
        %438 = vrot.lane.b32.xlu0 %v412, 127
        %v439 = vpop.permute.xlu0 %438
        %v449 = vadd.f32 %v350, %v423
        %v450 = vadd.f32 %v351, %v425
        %v451 = vadd.f32 %v352, %v427
        %v452 = vadd.f32 %v353, %v429
        %v453 = vadd.f32 %v354, %v431
        %v454 = vadd.f32 %v355, %v433
        %v455 = vadd.f32 %v356, %v435
        %v456 = vadd.f32 %v357, %v437
        %v457 = vadd.f32 %v358, %v439
        %458 = vrot.lane.b32.xlu0 %v350, 126
        %v459 = vpop.permute.xlu0 %458
        %460 = vrot.lane.b32.xlu0 %v351, 126
        %v461 = vpop.permute.xlu0 %460
        %462 = vrot.lane.b32.xlu0 %v352, 126
        %v463 = vpop.permute.xlu0 %462
        %464 = vrot.lane.b32.xlu0 %v353, 126
        %v465 = vpop.permute.xlu0 %464
        %466 = vrot.lane.b32.xlu0 %v354, 126
        %v467 = vpop.permute.xlu0 %466
        %468 = vrot.lane.b32.xlu0 %v355, 126
        %v469 = vpop.permute.xlu0 %468
        %470 = vrot.lane.b32.xlu0 %v356, 126
        %v471 = vpop.permute.xlu0 %470
        %472 = vrot.lane.b32.xlu0 %v357, 126
        %v473 = vpop.permute.xlu0 %472
        %474 = vrot.lane.b32.xlu0 %v358, 126
        %v475 = vpop.permute.xlu0 %474
        %v485 = vadd.f32 %v449, %v459
        %v486 = vadd.f32 %v450, %v461
        %v487 = vadd.f32 %v451, %v463
        %v488 = vadd.f32 %v452, %v465
        %v489 = vadd.f32 %v453, %v467
        %v490 = vadd.f32 %v454, %v469
        %v491 = vadd.f32 %v455, %v471
        %v492 = vadd.f32 %v456, %v473
        %v493 = vadd.f32 %v457, %v475
        %v494 = vmul.f32 %v395, 2.0
        %v495 = vmul.f32 %v396, 2.0
        %v496 = vmul.f32 %v397, 2.0
        %v497 = vmul.f32 %v398, 2.0
        %v498 = vmul.f32 %v399, 2.0
        %v499 = vmul.f32 %v400, 2.0
        %v500 = vmul.f32 %v401, 2.0
        %v501 = vmul.f32 %v402, 2.0
        %v502 = vmul.f32 %v403, 2.0
        %vm512 = vcmask 1046528
        %v513 = vrot.slane %v494, 1
        %v514 = vrot.slane %v495, 1
        %v515 = vsel %vm512, %v513, %v514
        %v516 = vrot.slane %v496, 1
        %v517 = vsel %vm512, %v514, %v516
        %v518 = vrot.slane %v497, 1
        %v519 = vrot.slane %v498, 1
        %v520 = vsel %vm512, %v518, %v519
        %v521 = vrot.slane %v499, 1
        %v522 = vsel %vm512, %v519, %v521
        %v523 = vrot.slane %v500, 1
        %v524 = vrot.slane %v501, 1
        %v525 = vsel %vm512, %v523, %v524
        %v526 = vrot.slane %v502, 1
        %v527 = vsel %vm512, %v524, %v526
        %v534 = vadd.f32 %v395, %v515
        %v535 = vadd.f32 %v396, %v517
        %v536 = vadd.f32 %v398, %v520
        %v537 = vadd.f32 %v399, %v522
        %v538 = vadd.f32 %v401, %v525
        %v539 = vadd.f32 %v402, %v527
        %vm549 = vcmask 1045504
        %v550 = vrot.slane %v395, 2
        %v551 = vrot.slane %v396, 2
        %v552 = vsel %vm549, %v550, %v551
        %v553 = vrot.slane %v397, 2
        %v554 = vsel %vm549, %v551, %v553
        %v555 = vrot.slane %v398, 2
        %v556 = vrot.slane %v399, 2
        %v557 = vsel %vm549, %v555, %v556
        %v558 = vrot.slane %v400, 2
        %v559 = vsel %vm549, %v556, %v558
        %v560 = vrot.slane %v401, 2
        %v561 = vrot.slane %v402, 2
        %v562 = vsel %vm549, %v560, %v561
        %v563 = vrot.slane %v403, 2
        %v564 = vsel %vm549, %v561, %v563
        %v571 = vadd.f32 %v534, %v552
        %v572 = vadd.f32 %v535, %v554
        %v573 = vadd.f32 %v536, %v557
        %v574 = vadd.f32 %v537, %v559
        %v575 = vadd.f32 %v538, %v562
        %v576 = vadd.f32 %v539, %v564
        %vm583 = vcmask 1041408
        %v584 = vrot.slane %v485, 6
        %v585 = vrot.slane %v486, 6
        %v586 = vsel %vm583, %v584, %v585
        %v587 = vrot.slane %v488, 6
        %v588 = vrot.slane %v489, 6
        %v589 = vsel %vm583, %v587, %v588
        %v590 = vrot.slane %v491, 6
        %v591 = vrot.slane %v492, 6
        %v592 = vsel %vm583, %v590, %v591
        %v602 = vsub.f32 %v485, %v584
        %v603 = vsub.f32 %v486, %v586
        %v604 = vsub.f32 %v487, %v585
        %v605 = vsub.f32 %v488, %v587
        %v606 = vsub.f32 %v489, %v589
        %v607 = vsub.f32 %v490, %v588
        %v608 = vsub.f32 %v491, %v590
        %v609 = vsub.f32 %v492, %v592
        %v610 = vsub.f32 %v493, %v591
        %v611 = vstv %s211
        %v612 = vmul.f32 %v611, %v571
        %v613 = vmul.f32 %v611, %v572
        %v614 = vmul.f32 %v611, %v573
        %v615 = vmul.f32 %v611, %v574
        %v616 = vmul.f32 %v611, %v575
        %v617 = vmul.f32 %v611, %v576
        %624 = vrot.lane.b32.xlu0 %v612, 126
        %v625 = vpop.permute.xlu0 %624
        %626 = vrot.lane.b32.xlu0 %v613, 126
        %v627 = vpop.permute.xlu0 %626
        %628 = vrot.lane.b32.xlu0 %v614, 126
        %v629 = vpop.permute.xlu0 %628
        %630 = vrot.lane.b32.xlu0 %v615, 126
        %v631 = vpop.permute.xlu0 %630
        %632 = vrot.lane.b32.xlu0 %v616, 126
        %v633 = vpop.permute.xlu0 %632
        %634 = vrot.lane.b32.xlu0 %v617, 126
        %v635 = vpop.permute.xlu0 %634
        %vm642 = vcmask 130048
        %643 = vst.msk [vmem:[%s178] sm:$0xff] %vm642, %v625
        %644 = vst.msk [vmem:[%s178 + $0x8] sm:$0xff] %vm642, %v627
        %645 = vst.msk [vmem:[%s178 + $0x10] sm:$0xff] %vm642, %v629
        %646 = vst.msk [vmem:[%s178 + $0x18] sm:$0xff] %vm642, %v631
        %647 = vst.msk [vmem:[%s178 + $0x20] sm:$0xff] %vm642, %v633
        %648 = vst.msk [vmem:[%s178 + $0x28] sm:$0xff] %vm642, %v635
        %v649 = vmul.f32 %v611, %v602
        %v650 = vmul.f32 %v611, %v603
        %v651 = vmul.f32 %v611, %v604
        %v652 = vmul.f32 %v611, %v605
        %v653 = vmul.f32 %v611, %v606
        %v654 = vmul.f32 %v611, %v607
        %v655 = vmul.f32 %v611, %v608
        %v656 = vmul.f32 %v611, %v609
        %v657 = vmul.f32 %v611, %v610
        %vm658 = vcmask 130050
        %659 = vst.msk [vmem:[%s185 - $0x2] sm:$0xfc] %vm658, %v649
        %660 = vst.msk [vmem:[%s185 + $0x6] sm:$0xff] %vm642, %v650
        %vm661 = vcmask 123904
        %662 = vst.msk [vmem:[%s185 + $0xe] sm:$0x3] %vm661, %v651
        %663 = vst.msk [vmem:[%s185 + $0xe] sm:$0xfc] %vm658, %v652
        %664 = vst.msk [vmem:[%s185 + $0x16] sm:$0xff] %vm642, %v653
        %665 = vst.msk [vmem:[%s185 + $0x1e] sm:$0x3] %vm661, %v654
        %666 = vst.msk [vmem:[%s185 + $0x1e] sm:$0xfc] %vm658, %v655
        %667 = vst.msk [vmem:[%s185 + $0x26] sm:$0xff] %vm642, %v656
        %668 = vst.msk [vmem:[%s185 + $0x2e] sm:$0x3] %vm661, %v657
        %s669 = sand.u32 %s81, 1
        %s670 = scalar_lea.sflag [#allocation3], %s669
        %s671 = sand.u32 %s81, 1
        %s672 = smul.addr %s671, 48
        %s673 = scalar_lea.vmem [#allocation2], %s672
        %s674 = sand.u32 %s107, 1
        %s675 = scalar_lea.sflag [#allocation5], %s674
        %s676 = sand.u32 %s107, 1
        %s677 = smul.addr %s676, 48
        %s678 = scalar_lea.vmem [#allocation4], %s677
        // Predicated region
        $region29: #{vgg_sobel_forward.1} parent=27 // pred_check
          %p679 = pneg %p91
        $region30: #{vgg_sobel_forward.1} parent=27 // pred_check_branch
          %681 = sbr.rel (%p679) target = $region32
        $region31: #{vgg_sobel_forward.1} parent=27 // pred_region
          %s683 = ssub.s32 768, 768
          %684 = vsyncadd %s670, %s683
          %s685 = smul.addr %s21, 6
          %s686 = smul.addr %s685, 128
          %s687 = scalar_lea.hbm %s2, %s686
          %s688 = sshll.u32 %s673, 4
          %s689 = int_to_ptr.vmem [resolvable:$true] %s688
          %694 = dma.vmem_to_hbm [thread:$0]  %s689, 768, %s687, %s670, 128, 128, 8
        $region32: #{vgg_sobel_forward.1} parent=27 // pred_fallthru
          _
        // Predicated region
        $region33: #{vgg_sobel_forward.1} parent=27 // pred_check
          %p695 = pneg %p117
        $region34: #{vgg_sobel_forward.1} parent=27 // pred_check_branch
          %697 = sbr.rel (%p695) target = $region36
        $region35: #{vgg_sobel_forward.1} parent=27 // pred_region
          %s699 = ssub.s32 768, 768
          %700 = vsyncadd %s675, %s699
          %s701 = smul.addr %s21, 6
          %s702 = smul.addr %s701, 128
          %s703 = scalar_lea.hbm %s3, %s702
          %s704 = sshll.u32 %s678, 4
          %s705 = int_to_ptr.vmem [resolvable:$true] %s704
          %710 = dma.vmem_to_hbm [thread:$0]  %s705, 768, %s703, %s675, 128, 128, 8
        $region36: #{vgg_sobel_forward.1} parent=27 // pred_fallthru
          _
      $region28: #{vgg_sobel_forward.1} parent=5 // pred_fallthru
        _
      %p711 = scmp.le.s32.totalorder 2, %s16
      // Predicated region
      $region37: #{vgg_sobel_forward.1} parent=5 // pred_check
        %p712 = pneg %p711
      $region38: #{vgg_sobel_forward.1} parent=5 // pred_check_branch
        %714 = sbr.rel (%p712) target = $region40
      $region39: #{vgg_sobel_forward.1} parent=5 // pred_region
        %s715 = ssub.s32 %s16, 2
        // Predicated region
        $region41: #{vgg_sobel_forward.1} parent=39 // pred_check
          %p716 = pneg %p97
        $region42: #{vgg_sobel_forward.1} parent=39 // pred_check_branch
          %718 = sbr.rel (%p716) target = $region44
        $region43: #{vgg_sobel_forward.1} parent=39 // pred_region
          %s719 = sand.u32 %s82, 1
          %s720 = scalar_lea.sflag [#allocation3], %s719
          %s721 = sand.u32 %s82, 1
          %s722 = smul.addr %s721, 48
          %s723 = scalar_lea.vmem [#allocation2], %s722
          %724 = dma.done %s720, 768
        $region44: #{vgg_sobel_forward.1} parent=39 // pred_fallthru
          _
        // Predicated region
        $region45: #{vgg_sobel_forward.1} parent=39 // pred_check
          %p725 = pneg %p123
        $region46: #{vgg_sobel_forward.1} parent=39 // pred_check_branch
          %727 = sbr.rel (%p725) target = $region48
        $region47: #{vgg_sobel_forward.1} parent=39 // pred_region
          %s728 = sand.u32 %s108, 1
          %s729 = scalar_lea.sflag [#allocation5], %s728
          %s730 = sand.u32 %s108, 1
          %s731 = smul.addr %s730, 48
          %s732 = scalar_lea.vmem [#allocation4], %s731
          %733 = dma.done %s729, 768
        $region48: #{vgg_sobel_forward.1} parent=39 // pred_fallthru
          _
      $region40: #{vgg_sobel_forward.1} parent=5 // pred_fallthru
        _
    $region6: #{vgg_sobel_forward.1} parent=1 // loop_footer
      %s20 = sadd.s32 1, %s16
    $region7: #{vgg_sobel_forward.1} parent=1 // loop_footer_branch
      %15 = sbr.rel target = $region3
    $region8: #{vgg_sobel_forward.1} parent=1 // loop_exit
      _
    %734 = vsyncpa [#allocation3], 1
    %s735 = scalar_lea.sflag [#allocation3], 1
    %736 = vsyncpa %s735, 1
    %737 = vsyncpa [#allocation5], 1
    %s738 = scalar_lea.sflag [#allocation5], 1
    %739 = vsyncpa %s738, 1

</llo_original>
